<compile_context>
chip_gen: v6e
topology: v6e:2x2x1
jax: 0.10.0
libtpu: 0.0.40
codegen_flags: <defaults>
</compile_context>

<pallas_src>
import functools

import jax
import jax.numpy as jnp
import numpy as np
from jax.experimental import pallas as pl
from jax.experimental.pallas import tpu as pltpu


def _fourier_pe_kernel(xg_ref, w_ref, out_ref):
    # xg_ref:  (TRg, G*M)      packed positions: xg[i, g*M + m] = x[i*G + g, m]
    # w_ref:   (G*M, G*F_dim)  block-diag(repeat_interleave(Wr.T, 2, axis=1))
    # out_ref: (2, TRg, G*F_dim) stacked [cos, sin], lane-dense
    proj = jnp.dot(xg_ref[...], w_ref[...],
                   preferred_element_type=jnp.float32,
                   precision=jax.lax.Precision.HIGHEST)
    out_ref[0] = jnp.cos(proj)
    out_ref[1] = jnp.sin(proj)


def _round_up(a, b):
    return ((a + b - 1) // b) * b


def _choose_group(f_dim):
    # Pack G consecutive keypoints into the lane axis; aim for a 256-lane
    # output slab (full, unmasked stores on all generations).
    for target in (256, 128):
        if f_dim <= target and target % f_dim == 0:
            return target // f_dim
    return 1


@jax.jit
def learnable_fourier_pe(x, wr_weight):
    """x: [B, N, M] float32; wr_weight: [F_half, M] (PyTorch nn.Linear layout).

    Returns emb: [2, B, 1, N, 2*F_half] float32, matching the PyTorch forward.
    """
    B, N, M = x.shape
    F_half = wr_weight.shape[0]
    F_dim = 2 * F_half
    R = B * N

    G = _choose_group(F_dim)
    GM, GF = G * M, G * F_dim
    ALIGN = 8 * G                       # packed rows sit on sublanes: need x8

    # Fold repeat_interleave(2, dim=-1) into the weight columns (exact: cos/sin
    # are elementwise), then build the block-diagonal lane-packing weight.
    w_dup = jnp.repeat(wr_weight.T.astype(jnp.float32), 2, axis=1)      # (M, F_dim)
    w_big = jnp.kron(jnp.eye(G, dtype=jnp.float32), w_dup)              # (GM, GF)

    # Row padding / tiling: ~4 MiB of output per grid step; even #steps when
    # tiled so the "parallel" axis shards across both TensorCores on v7x.
    R_pad = _round_up(R, ALIGN)
    TR_max = max(ALIGN, ((4 * 1024 * 1024) // (8 * F_dim) // ALIGN) * ALIGN)
    if R_pad <= TR_max:
        TR, steps = R_pad, 1
    else:
        steps = _round_up(pl.cdiv(R_pad, TR_max), 2)
        TR = _round_up(pl.cdiv(R_pad, steps), ALIGN)
        R_pad = TR * steps

    x_flat = x.reshape(R, M).astype(jnp.float32)
    if R_pad != R:
        x_flat = jnp.pad(x_flat, ((0, R_pad - R), (0, 0)))
    Rg, TRg = R_pad // G, TR // G
    xg = x_flat.reshape(Rg, GM)         # metadata-only packing

    out = pl.pallas_call(
        _fourier_pe_kernel,
        out_shape=jax.ShapeDtypeStruct((2, Rg, GF), jnp.float32),
        grid_spec=pl.GridSpec(
            grid=(steps,),
            in_specs=[
                pl.BlockSpec((TRg, GM), lambda r: (r, 0)),
                pl.BlockSpec((GM, GF), lambda r: (0, 0)),   # constant: no re-DMA
            ],
            out_specs=pl.BlockSpec((2, TRg, GF), lambda r: (0, r, 0)),
        ),
        compiler_params=pltpu.CompilerParams(
            dimension_semantics=("parallel",)),
    )(xg, w_big)

    # (2, Rg, G*F_dim) is row-major identical to (2, R_pad, F_dim).
    out = out.reshape(2, R_pad, F_dim)
    if R_pad != R:
        out = out[:, :R, :]
    return out.reshape(2, B, N, F_dim)[:, :, None, :, :]


def _reference(x, wr_weight):
    # Exact f32 reference (VPU broadcast multiply-add, no MXU rounding modes).
    proj = (x[:, :, None, :] * wr_weight[None, None, :, :]).sum(-1)     # (B,N,F_half)
    emb = jnp.stack([jnp.cos(proj), jnp.sin(proj)], axis=0)[:, :, None, :, :]
    return jnp.repeat(emb, 2, axis=-1)                                  # (2,B,1,N,F_dim)


if __name__ == "__main__":
    # Module config (LightGlue usage: M=2 keypoint coords).
    M = 2
    dim = 32                    # F_dim defaults to dim
    F_dim = dim
    F_half = F_dim // 2
    gamma = 1.0

    key = jax.random.PRNGKey(0)
    k_w, k_x1, k_x2 = jax.random.split(key, 3)
    # nn.init.normal_(Wr.weight, mean=0, std=gamma**-2); weight shape (F_half, M)
    wr_weight = (gamma ** -2) * jax.random.normal(k_w, (F_half, M), dtype=jnp.float32)

    # Case 1: small, nicely shaped batch of keypoints.
    B, N = 2, 8
    x = jax.random.uniform(k_x1, (B, N, M), dtype=jnp.float32, minval=-1.0, maxval=1.0)
    emb = jax.block_until_ready(learnable_fourier_pe(x, wr_weight))
    ref = _reference(x, wr_weight)
    assert emb.shape == (2, B, 1, N, F_dim), emb.shape
    np.testing.assert_allclose(np.asarray(emb), np.asarray(ref), rtol=1e-4, atol=1e-4)

    # Case 2: odd keypoint count — exercises row padding / slice-off path.
    B2, N2 = 2, 13
    x2 = jax.random.uniform(k_x2, (B2, N2, M), dtype=jnp.float32, minval=-1.0, maxval=1.0)
    emb2 = jax.block_until_ready(learnable_fourier_pe(x2, wr_weight))
    ref2 = _reference(x2, wr_weight)
    assert emb2.shape == (2, B2, 1, N2, F_dim), emb2.shape
    np.testing.assert_allclose(np.asarray(emb2), np.asarray(ref2), rtol=1e-4, atol=1e-4)

    print("KERNEL_OK")
</pallas_src>

<mosaic_0001>
module attributes {stable_mosaic.version = 11 : i64} {
  func.func @_fourier_pe_kernel(%arg0: i32, %arg1: memref<8x16xf32, #tpu.memory_space<vmem>>, %arg2: memref<16x256xf32, #tpu.memory_space<vmem>>, %arg3: memref<2x8x256xf32, #tpu.memory_space<vmem>>) attributes {dimension_semantics = [#tpu.dimension_semantics<parallel>], iteration_bounds = array<i64: 1>, scalar_prefetch = 0 : i64, scratch_operands = 0 : i64, tpu.core_type = #tpu.core_type<tc>, window_params = [{transform_indices = @transform_0, window_bounds = array<i64: 8, 16>}, {pipeline_mode = #tpu.pipeline_mode<synchronous>, transform_indices = @transform_1, window_bounds = array<i64: 16, 256>}, {transform_indices = @transform_2, window_bounds = array<i64: 2, 8, 256>}]} {
    %c0 = arith.constant 0 : index
    %c0_0 = arith.constant 0 : index
    %0 = vector.load %arg1[%c0, %c0_0] : memref<8x16xf32, #tpu.memory_space<vmem>>, vector<8x16xf32>
    %c0_1 = arith.constant 0 : index
    %c0_2 = arith.constant 0 : index
    %1 = vector.load %arg2[%c0_1, %c0_2] : memref<16x256xf32, #tpu.memory_space<vmem>>, vector<16x256xf32>
    %cst = arith.constant dense<0.000000e+00> : vector<8x256xf32>
    %2 = tpu.matmul %0, %1, %cst {dimension_numbers = #tpu.dot_dimension_numbers<[1], [0], [0], [1], [0, 0, 1, 1], [], []>, precision = #tpu.contract_precision<fp32>} : vector<8x16xf32>, vector<16x256xf32>, vector<8x256xf32> -> vector<8x256xf32>
    %3 = math.cos %2 : vector<8x256xf32>
    %c0_3 = arith.constant 0 : index
    %c0_4 = arith.constant 0 : index
    %c0_5 = arith.constant 0 : index
    %4 = vector.load %arg3[%c0_3, %c0_4, %c0_5] : memref<2x8x256xf32, #tpu.memory_space<vmem>>, vector<1x8x256xf32>
    %5 = vector.shape_cast %4 : vector<1x8x256xf32> to vector<8x256xf32>
    %6 = vector.shape_cast %3 : vector<8x256xf32> to vector<1x8x256xf32>
    tpu.vector_store %arg3[%c0_3, %c0_4, %c0_5], %6 {strides = array<i32>} : memref<2x8x256xf32, #tpu.memory_space<vmem>>, vector<1x8x256xf32>,
    %7 = math.sin %2 : vector<8x256xf32>
    %c1 = arith.constant 1 : index
    %c0_6 = arith.constant 0 : index
    %c0_7 = arith.constant 0 : index
    %8 = vector.load %arg3[%c1, %c0_6, %c0_7] : memref<2x8x256xf32, #tpu.memory_space<vmem>>, vector<1x8x256xf32>
    %9 = vector.shape_cast %8 : vector<1x8x256xf32> to vector<8x256xf32>
    %10 = vector.shape_cast %7 : vector<8x256xf32> to vector<1x8x256xf32>
    tpu.vector_store %arg3[%c1, %c0_6, %c0_7], %10 {strides = array<i32>} : memref<2x8x256xf32, #tpu.memory_space<vmem>>, vector<1x8x256xf32>,
    return
  }
  func.func @transform_0(%arg0: i32) -> (i32, i32) {
    %c0_i32 = arith.constant 0 : i32
    %c0_i32_0 = arith.constant 0 : i32
    return %arg0, %c0_i32 : i32, i32
  }
  func.func @transform_1(%arg0: i32) -> (i32, i32) {
    %c0_i32 = arith.constant 0 : i32
    %c0_i32_0 = arith.constant 0 : i32
    %c0_i32_1 = arith.constant 0 : i32
    return %c0_i32, %c0_i32_0 : i32, i32
  }
  func.func @transform_2(%arg0: i32) -> (i32, i32, i32) {
    %c0_i32 = arith.constant 0 : i32
    %c0_i32_0 = arith.constant 0 : i32
    %c0_i32_1 = arith.constant 0 : i32
    return %c0_i32, %arg0, %c0_i32_0 : i32, i32, i32
  }
}

</mosaic_0001>

<llo_original>
// kernel: mul.4
$region0: #{mul.4}
  %s0 = inlined_call_operand.vmem [shape: f32[2,16,2], index: 0, kind: input, shape index: {}]
  %s1 = inlined_call_operand.vmem [shape: f32[2,32], index: 1, kind: output, shape index: {}]
  $region1: #{mul.4} parent=0
    #allocation0 [shape = 'u8[4096]{0}', space=vmem, size = 0x1000, scoped, tag = 'scoped mem for output reshape']
    %s2 = smov 3
    %v3 = vld [vmem:[%s0] ss:$16 sm:%s2]
    %vm4 = vcmask 15360
    %5 = vst.msk [vmem:[#allocation0] sm:$0x3] %vm4, %v3
    %s6 = scalar_lea.vmem %s0, 15
    %s7 = smov 3
    %v8 = vld [vmem:[%s6] ss:$16 sm:%s7]
    %9 = vrot.lane.b32.xlu0 %v8, 30
    %v10 = vpop.permute.xlu0 %9
    %vm11 = vcmask 261360
    %12 = vst.msk [vmem:[#allocation0] sm:$0x3] %vm11, %v10
    %s13 = scalar_lea.vmem %s0, 14
    %s14 = smov 3
    %v15 = vld [vmem:[%s13] ss:$16 sm:%s14]
    %16 = vrot.lane.b32.xlu0 %v15, 28
    %v17 = vpop.permute.xlu0 %16
    %vm18 = vcmask 244960
    %19 = vst.msk [vmem:[#allocation0] sm:$0x3] %vm18, %v17
    %s20 = scalar_lea.vmem %s0, 13
    %s21 = smov 3
    %v22 = vld [vmem:[%s20] ss:$16 sm:%s21]
    %23 = vrot.lane.b32.xlu0 %v22, 26
    %v24 = vpop.permute.xlu0 %23
    %vm25 = vcmask 228560
    %26 = vst.msk [vmem:[#allocation0] sm:$0x3] %vm25, %v24
    %s27 = scalar_lea.vmem %s0, 12
    %s28 = smov 3
    %v29 = vld [vmem:[%s27] ss:$16 sm:%s28]
    %30 = vrot.lane.b32.xlu0 %v29, 24
    %v31 = vpop.permute.xlu0 %30
    %vm32 = vcmask 212160
    %33 = vst.msk [vmem:[#allocation0] sm:$0x3] %vm32, %v31
    %s34 = scalar_lea.vmem %s0, 11
    %s35 = smov 3
    %v36 = vld [vmem:[%s34] ss:$16 sm:%s35]
    %37 = vrot.lane.b32.xlu0 %v36, 22
    %v38 = vpop.permute.xlu0 %37
    %vm39 = vcmask 195760
    %40 = vst.msk [vmem:[#allocation0] sm:$0x3] %vm39, %v38
    %s41 = scalar_lea.vmem %s0, 10
    %s42 = smov 3
    %v43 = vld [vmem:[%s41] ss:$16 sm:%s42]
    %44 = vrot.lane.b32.xlu0 %v43, 20
    %v45 = vpop.permute.xlu0 %44
    %vm46 = vcmask 179360
    %47 = vst.msk [vmem:[#allocation0] sm:$0x3] %vm46, %v45
    %s48 = scalar_lea.vmem %s0, 9
    %s49 = smov 3
    %v50 = vld [vmem:[%s48] ss:$16 sm:%s49]
    %51 = vrot.lane.b32.xlu0 %v50, 18
    %v52 = vpop.permute.xlu0 %51
    %vm53 = vcmask 162960
    %54 = vst.msk [vmem:[#allocation0] sm:$0x3] %vm53, %v52
    %s55 = scalar_lea.vmem %s0, 8
    %s56 = smov 3
    %v57 = vld [vmem:[%s55] ss:$16 sm:%s56]
    %58 = vrot.lane.b32.xlu0 %v57, 16
    %v59 = vpop.permute.xlu0 %58
    %vm60 = vcmask 146560
    %61 = vst.msk [vmem:[#allocation0] sm:$0x3] %vm60, %v59
    %s62 = scalar_lea.vmem %s0, 7
    %s63 = smov 3
    %v64 = vld [vmem:[%s62] ss:$16 sm:%s63]
    %65 = vrot.lane.b32.xlu0 %v64, 14
    %v66 = vpop.permute.xlu0 %65
    %vm67 = vcmask 130160
    %68 = vst.msk [vmem:[#allocation0] sm:$0x3] %vm67, %v66
    %s69 = scalar_lea.vmem %s0, 6
    %s70 = smov 3
    %v71 = vld [vmem:[%s69] ss:$16 sm:%s70]
    %72 = vrot.lane.b32.xlu0 %v71, 12
    %v73 = vpop.permute.xlu0 %72
    %vm74 = vcmask 113760
    %75 = vst.msk [vmem:[#allocation0] sm:$0x3] %vm74, %v73
    %s76 = scalar_lea.vmem %s0, 5
    %s77 = smov 3
    %v78 = vld [vmem:[%s76] ss:$16 sm:%s77]
    %79 = vrot.lane.b32.xlu0 %v78, 10
    %v80 = vpop.permute.xlu0 %79
    %vm81 = vcmask 97360
    %82 = vst.msk [vmem:[#allocation0] sm:$0x3] %vm81, %v80
    %s83 = scalar_lea.vmem %s0, 4
    %s84 = smov 3
    %v85 = vld [vmem:[%s83] ss:$16 sm:%s84]
    %86 = vrot.lane.b32.xlu0 %v85, 8
    %v87 = vpop.permute.xlu0 %86
    %vm88 = vcmask 80960
    %89 = vst.msk [vmem:[#allocation0] sm:$0x3] %vm88, %v87
    %s90 = scalar_lea.vmem %s0, 3
    %s91 = smov 3
    %v92 = vld [vmem:[%s90] ss:$16 sm:%s91]
    %93 = vrot.lane.b32.xlu0 %v92, 6
    %v94 = vpop.permute.xlu0 %93
    %vm95 = vcmask 64560
    %96 = vst.msk [vmem:[#allocation0] sm:$0x3] %vm95, %v94
    %s97 = scalar_lea.vmem %s0, 2
    %s98 = smov 3
    %v99 = vld [vmem:[%s97] ss:$16 sm:%s98]
    %100 = vrot.lane.b32.xlu0 %v99, 4
    %v101 = vpop.permute.xlu0 %100
    %vm102 = vcmask 48160
    %103 = vst.msk [vmem:[#allocation0] sm:$0x3] %vm102, %v101
    %s104 = scalar_lea.vmem %s0, 1
    %s105 = smov 3
    %v106 = vld [vmem:[%s104] ss:$16 sm:%s105]
    %107 = vrot.lane.b32.xlu0 %v106, 2
    %v108 = vpop.permute.xlu0 %107
    %vm109 = vcmask 31760
    %110 = vst.msk [vmem:[#allocation0] sm:$0x3] %vm109, %v108
    %s112 = sshll.u32 1, 2
    %s113 = ssub.s32 %s112, 1
    %v115 = vld [vmem:[#allocation0] sm:%s113]
    %s116 = sshll.u32 1, 2
    %s117 = ssub.s32 %s116, 1
    %118 = vst [vmem:[%s1] sm:%s117] %v115

// kernel: learnable_fourier_pe.1
$region0: #{learnable_fourier_pe.1}
  #allocation0 [shape = 'u32[]', space=smem, size = 0x4, offset = 0x4, fixed_abs, tag = 'smem constant byte address 0x4 - core index']
  #allocation1 [shape = 'u32[144,128]{1,0:T(1,128)}', space=vmem, size = 0x12000, scoped, tag = 'internal scratch']
  %s0 = inlined_call_operand.vmem [shape: f32[8,16], index: 0, kind: input, shape index: {}]
  %s1 = inlined_call_operand.vmem [shape: f32[16,256], index: 1, kind: input, shape index: {}]
  %s2 = inlined_call_operand.vmem [shape: f32[2,8,256], index: 2, kind: output, shape index: {}]
  %s3 = sld [smem:[#allocation0]]
  $region18: #{learnable_fourier_pe.1} parent=0
    _
  %s5 = ssub.s32 1, %s3
  %s6 = scalar_select 0, %s5, %s3
  // Predicated region
  $region2: #{learnable_fourier_pe.1} parent=0 // pred_check
    _
  $region3: #{learnable_fourier_pe.1} parent=0 // pred_check_branch
    %8 = sbr.rel (0) target = $region5
  $region4: #{learnable_fourier_pe.1} parent=0 // pred_region
    _
  $region5: #{learnable_fourier_pe.1} parent=0 // pred_fallthru
    _
  // Predicated region
  $region6: #{learnable_fourier_pe.1} parent=0 // pred_check
    _
  $region7: #{learnable_fourier_pe.1} parent=0 // pred_check_branch
    %10 = sbr.rel (0) target = $region9
  $region8: #{learnable_fourier_pe.1} parent=0 // pred_region
    _
  $region9: #{learnable_fourier_pe.1} parent=0 // pred_fallthru
    _
  %v11 = vld [vmem:[%s0] sm:$0xff]
  %v12 = vld [vmem:[%s1] sm:$0xff]
  %v13 = vld [vmem:[%s1 + $0x8] sm:$0xff]
  %v14 = vld [vmem:[%s1 + $0x10] sm:$0xff]
  %v15 = vld [vmem:[%s1 + $0x18] sm:$0xff]
  %vm16 = vcmask 130048
  %v18 = vsel %vm16, %v11, 0
  %20 = vmatprep.subr.mxu0 0.0
  %21 = vmatpush1.msra.mxu0 0.0
  %22 = vmatprep.subr.mxu0 0.0
  %23 = vmatpush1.msra.mxu0 0.0
  %24 = vmatprep.subr.mxu0 0.0
  %25 = vmatpush1.msra.mxu0 0.0
  %26 = vmatprep.subr.mxu0 0.0
  %27 = vmatpush1.msra.mxu0 0.0
  %28 = vmatprep.subr.mxu0 0.0
  %29 = vmatpush1.msra.mxu0 0.0
  %30 = vmatprep.subr.mxu0 0.0
  %31 = vmatpush1.msra.mxu0 0.0
  %32 = vmatprep.subr.mxu0 0.0
  %33 = vmatpush1.msra.mxu0 0.0
  %34 = vmatprep.subr.mxu0 0.0
  %35 = vmatpush1.msra.mxu0 0.0
  %36 = vmatprep.subr.mxu0 0.0
  %37 = vmatpush1.msra.mxu0 0.0
  %38 = vmatprep.subr.mxu0 0.0
  %39 = vmatpush1.msra.mxu0 0.0
  %40 = vmatprep.subr.mxu0 0.0
  %41 = vmatpush1.msra.mxu0 0.0
  %42 = vmatprep.subr.mxu0 0.0
  %43 = vmatpush1.msra.mxu0 0.0
  %44 = vmatprep.subr.mxu0 0.0
  %45 = vmatpush1.msra.mxu0 0.0
  %46 = vmatprep.subr.mxu0 0.0
  %47 = vmatpush1.msra.mxu0 0.0
  %v48 = vand.u32 %v15, 4294901760
  %49 = vmatprep.subr.mxu0 %v48
  %v50 = vand.u32 %v14, 4294901760
  %51 = vmatpush1.msra.mxu0 %v50
  %v52 = vand.u32 %v13, 4294901760
  %53 = vmatprep.subr.mxu0 %v52
  %v54 = vand.u32 %v12, 4294901760
  %55 = vmatpush1.msra.mxu0 %v54
  %56 = vmatprep.subr.mxu0 0.0
  %57 = vmatpush2.msra.mxu0 0.0
  %58 = vmatprep.subr.mxu0 0.0
  %59 = vmatpush2.msra.mxu0 0.0
  %60 = vmatprep.subr.mxu0 0.0
  %61 = vmatpush2.msra.mxu0 0.0
  %62 = vmatprep.subr.mxu0 0.0
  %63 = vmatpush2.msra.mxu0 0.0
  %64 = vmatprep.subr.mxu0 0.0
  %65 = vmatpush2.msra.mxu0 0.0
  %66 = vmatprep.subr.mxu0 0.0
  %67 = vmatpush2.msra.mxu0 0.0
  %68 = vmatprep.subr.mxu0 0.0
  %69 = vmatpush2.msra.mxu0 0.0
  %70 = vmatprep.subr.mxu0 0.0
  %71 = vmatpush2.msra.mxu0 0.0
  %72 = vmatprep.subr.mxu0 0.0
  %73 = vmatpush2.msra.mxu0 0.0
  %74 = vmatprep.subr.mxu0 0.0
  %75 = vmatpush2.msra.mxu0 0.0
  %76 = vmatprep.subr.mxu0 0.0
  %77 = vmatpush2.msra.mxu0 0.0
  %78 = vmatprep.subr.mxu0 0.0
  %79 = vmatpush2.msra.mxu0 0.0
  %80 = vmatprep.subr.mxu0 0.0
  %81 = vmatpush2.msra.mxu0 0.0
  %82 = vmatprep.subr.mxu0 0.0
  %83 = vmatpush2.msra.mxu0 0.0
  %84 = vmatprep.subr.mxu0 0.0
  %85 = vmatpush2.msra.mxu0 0.0
  %86 = vmatprep.subr.mxu0 0.0
  %87 = vmatpush2.msra.mxu0 0.0
  %88 = vmatprep.mubr.f32.mxu0 0.0
  %v89 = vand.u32 %v18, 4294901760
  %v90 = vsub.f32 %v18, %v89
  %v91 = vand.u32 %v90, 4294901760
  %v92 = vsub.f32 %v90, %v91
  %v93 = vand.u32 %v92, 4294901760
  %94 = vmatmul.mubr.f32.gmra.mxu0 %v93
  %v95 = vpop.f32.mrf.mxu0
  %v96 = vadd.f32 0.0, %v95
  %v97 = vpop.f32.mrf.mxu0
  %v98 = vadd.f32 0.0, %v97
  %99 = vdwg.mxu0
  %100 = vmatprep.subr.mxu0 0.0
  %101 = vmatpush1.msra.mxu0 0.0
  %102 = vmatprep.subr.mxu0 0.0
  %103 = vmatpush1.msra.mxu0 0.0
  %104 = vmatprep.subr.mxu0 0.0
  %105 = vmatpush1.msra.mxu0 0.0
  %106 = vmatprep.subr.mxu0 0.0
  %107 = vmatpush1.msra.mxu0 0.0
  %108 = vmatprep.subr.mxu0 0.0
  %109 = vmatpush1.msra.mxu0 0.0
  %110 = vmatprep.subr.mxu0 0.0
  %111 = vmatpush1.msra.mxu0 0.0
  %112 = vmatprep.subr.mxu0 0.0
  %113 = vmatpush1.msra.mxu0 0.0
  %114 = vmatprep.subr.mxu0 0.0
  %115 = vmatpush1.msra.mxu0 0.0
  %116 = vmatprep.subr.mxu0 0.0
  %117 = vmatpush1.msra.mxu0 0.0
  %118 = vmatprep.subr.mxu0 0.0
  %119 = vmatpush1.msra.mxu0 0.0
  %120 = vmatprep.subr.mxu0 0.0
  %121 = vmatpush1.msra.mxu0 0.0
  %122 = vmatprep.subr.mxu0 0.0
  %123 = vmatpush1.msra.mxu0 0.0
  %124 = vmatprep.subr.mxu0 0.0
  %125 = vmatpush1.msra.mxu0 0.0
  %126 = vmatprep.subr.mxu0 0.0
  %127 = vmatpush1.msra.mxu0 0.0
  %v128 = vand.u32 %v15, 4294901760
  %v129 = vsub.f32 %v15, %v128
  %v130 = vand.u32 %v129, 4294901760
  %v131 = vsub.f32 %v129, %v130
  %v132 = vand.u32 %v131, 4294901760
  %133 = vmatprep.subr.mxu0 %v132
  %v134 = vand.u32 %v14, 4294901760
  %v135 = vsub.f32 %v14, %v134
  %v136 = vand.u32 %v135, 4294901760
  %v137 = vsub.f32 %v135, %v136
  %v138 = vand.u32 %v137, 4294901760
  %139 = vmatpush1.msra.mxu0 %v138
  %v140 = vand.u32 %v13, 4294901760
  %v141 = vsub.f32 %v13, %v140
  %v142 = vand.u32 %v141, 4294901760
  %v143 = vsub.f32 %v141, %v142
  %v144 = vand.u32 %v143, 4294901760
  %145 = vmatprep.subr.mxu0 %v144
  %v146 = vand.u32 %v12, 4294901760
  %v147 = vsub.f32 %v12, %v146
  %v148 = vand.u32 %v147, 4294901760
  %v149 = vsub.f32 %v147, %v148
  %v150 = vand.u32 %v149, 4294901760
  %151 = vmatpush1.msra.mxu0 %v150
  %152 = vmatprep.subr.mxu0 0.0
  %153 = vmatpush2.msra.mxu0 0.0
  %154 = vmatprep.subr.mxu0 0.0
  %155 = vmatpush2.msra.mxu0 0.0
  %156 = vmatprep.subr.mxu0 0.0
  %157 = vmatpush2.msra.mxu0 0.0
  %158 = vmatprep.subr.mxu0 0.0
  %159 = vmatpush2.msra.mxu0 0.0
  %160 = vmatprep.subr.mxu0 0.0
  %161 = vmatpush2.msra.mxu0 0.0
  %162 = vmatprep.subr.mxu0 0.0
  %163 = vmatpush2.msra.mxu0 0.0
  %164 = vmatprep.subr.mxu0 0.0
  %165 = vmatpush2.msra.mxu0 0.0
  %166 = vmatprep.subr.mxu0 0.0
  %167 = vmatpush2.msra.mxu0 0.0
  %168 = vmatprep.subr.mxu0 0.0
  %169 = vmatpush2.msra.mxu0 0.0
  %170 = vmatprep.subr.mxu0 0.0
  %171 = vmatpush2.msra.mxu0 0.0
  %172 = vmatprep.subr.mxu0 0.0
  %173 = vmatpush2.msra.mxu0 0.0
  %174 = vmatprep.subr.mxu0 0.0
  %175 = vmatpush2.msra.mxu0 0.0
  %176 = vmatprep.subr.mxu0 0.0
  %177 = vmatpush2.msra.mxu0 0.0
  %178 = vmatprep.subr.mxu0 0.0
  %179 = vmatpush2.msra.mxu0 0.0
  %180 = vmatprep.subr.mxu0 0.0
  %181 = vmatpush2.msra.mxu0 0.0
  %182 = vmatprep.subr.mxu0 0.0
  %183 = vmatpush2.msra.mxu0 0.0
  %184 = vmatprep.mubr.f32.mxu0 0.0
  %v185 = vand.u32 %v18, 4294901760
  %186 = vmatmul.mubr.f32.gmra.mxu0 %v185
  %v187 = vpop.f32.mrf.mxu0
  %v188 = vadd.f32 %v96, %v187
  %v189 = vpop.f32.mrf.mxu0
  %v190 = vadd.f32 %v98, %v189
  %191 = vdwg.mxu0
  %192 = vmatprep.subr.mxu0 0.0
  %193 = vmatpush1.msra.mxu0 0.0
  %194 = vmatprep.subr.mxu0 0.0
  %195 = vmatpush1.msra.mxu0 0.0
  %196 = vmatprep.subr.mxu0 0.0
  %197 = vmatpush1.msra.mxu0 0.0
  %198 = vmatprep.subr.mxu0 0.0
  %199 = vmatpush1.msra.mxu0 0.0
  %200 = vmatprep.subr.mxu0 0.0
  %201 = vmatpush1.msra.mxu0 0.0
  %202 = vmatprep.subr.mxu0 0.0
  %203 = vmatpush1.msra.mxu0 0.0
  %204 = vmatprep.subr.mxu0 0.0
  %205 = vmatpush1.msra.mxu0 0.0
  %206 = vmatprep.subr.mxu0 0.0
  %207 = vmatpush1.msra.mxu0 0.0
  %208 = vmatprep.subr.mxu0 0.0
  %209 = vmatpush1.msra.mxu0 0.0
  %210 = vmatprep.subr.mxu0 0.0
  %211 = vmatpush1.msra.mxu0 0.0
  %212 = vmatprep.subr.mxu0 0.0
  %213 = vmatpush1.msra.mxu0 0.0
  %214 = vmatprep.subr.mxu0 0.0
  %215 = vmatpush1.msra.mxu0 0.0
  %216 = vmatprep.subr.mxu0 0.0
  %217 = vmatpush1.msra.mxu0 0.0
  %218 = vmatprep.subr.mxu0 0.0
  %219 = vmatpush1.msra.mxu0 0.0
  %v220 = vand.u32 %v15, 4294901760
  %v221 = vsub.f32 %v15, %v220
  %222 = vmatprep.subr.mxu0 %v221
  %v223 = vand.u32 %v14, 4294901760
  %v224 = vsub.f32 %v14, %v223
  %225 = vmatpush1.msra.mxu0 %v224
  %v226 = vand.u32 %v13, 4294901760
  %v227 = vsub.f32 %v13, %v226
  %228 = vmatprep.subr.mxu0 %v227
  %v229 = vand.u32 %v12, 4294901760
  %v230 = vsub.f32 %v12, %v229
  %231 = vmatpush1.msra.mxu0 %v230
  %232 = vmatprep.subr.mxu0 0.0
  %233 = vmatpush2.msra.mxu0 0.0
  %234 = vmatprep.subr.mxu0 0.0
  %235 = vmatpush2.msra.mxu0 0.0
  %236 = vmatprep.subr.mxu0 0.0
  %237 = vmatpush2.msra.mxu0 0.0
  %238 = vmatprep.subr.mxu0 0.0
  %239 = vmatpush2.msra.mxu0 0.0
  %240 = vmatprep.subr.mxu0 0.0
  %241 = vmatpush2.msra.mxu0 0.0
  %242 = vmatprep.subr.mxu0 0.0
  %243 = vmatpush2.msra.mxu0 0.0
  %244 = vmatprep.subr.mxu0 0.0
  %245 = vmatpush2.msra.mxu0 0.0
  %246 = vmatprep.subr.mxu0 0.0
  %247 = vmatpush2.msra.mxu0 0.0
  %248 = vmatprep.subr.mxu0 0.0
  %249 = vmatpush2.msra.mxu0 0.0
  %250 = vmatprep.subr.mxu0 0.0
  %251 = vmatpush2.msra.mxu0 0.0
  %252 = vmatprep.subr.mxu0 0.0
  %253 = vmatpush2.msra.mxu0 0.0
  %254 = vmatprep.subr.mxu0 0.0
  %255 = vmatpush2.msra.mxu0 0.0
  %256 = vmatprep.subr.mxu0 0.0
  %257 = vmatpush2.msra.mxu0 0.0
  %258 = vmatprep.subr.mxu0 0.0
  %259 = vmatpush2.msra.mxu0 0.0
  %260 = vmatprep.subr.mxu0 0.0
  %261 = vmatpush2.msra.mxu0 0.0
  %262 = vmatprep.subr.mxu0 0.0
  %263 = vmatpush2.msra.mxu0 0.0
  %264 = vmatprep.mubr.f32.mxu0 0.0
  %v265 = vand.u32 %v18, 4294901760
  %v266 = vsub.f32 %v18, %v265
  %267 = vmatmul.mubr.f32.gmra.mxu0 %v266
  %v268 = vpop.f32.mrf.mxu0
  %v269 = vadd.f32 %v188, %v268
  %v270 = vpop.f32.mrf.mxu0
  %v271 = vadd.f32 %v190, %v270
  %272 = vdwg.mxu0
  %273 = vmatprep.subr.mxu0 0.0
  %274 = vmatpush1.msra.mxu0 0.0
  %275 = vmatprep.subr.mxu0 0.0
  %276 = vmatpush1.msra.mxu0 0.0
  %277 = vmatprep.subr.mxu0 0.0
  %278 = vmatpush1.msra.mxu0 0.0
  %279 = vmatprep.subr.mxu0 0.0
  %280 = vmatpush1.msra.mxu0 0.0
  %281 = vmatprep.subr.mxu0 0.0
  %282 = vmatpush1.msra.mxu0 0.0
  %283 = vmatprep.subr.mxu0 0.0
  %284 = vmatpush1.msra.mxu0 0.0
  %285 = vmatprep.subr.mxu0 0.0
  %286 = vmatpush1.msra.mxu0 0.0
  %287 = vmatprep.subr.mxu0 0.0
  %288 = vmatpush1.msra.mxu0 0.0
  %289 = vmatprep.subr.mxu0 0.0
  %290 = vmatpush1.msra.mxu0 0.0
  %291 = vmatprep.subr.mxu0 0.0
  %292 = vmatpush1.msra.mxu0 0.0
  %293 = vmatprep.subr.mxu0 0.0
  %294 = vmatpush1.msra.mxu0 0.0
  %295 = vmatprep.subr.mxu0 0.0
  %296 = vmatpush1.msra.mxu0 0.0
  %297 = vmatprep.subr.mxu0 0.0
  %298 = vmatpush1.msra.mxu0 0.0
  %299 = vmatprep.subr.mxu0 0.0
  %300 = vmatpush1.msra.mxu0 0.0
  %v301 = vand.u32 %v15, 4294901760
  %302 = vmatprep.subr.mxu0 %v301
  %v303 = vand.u32 %v14, 4294901760
  %304 = vmatpush1.msra.mxu0 %v303
  %v305 = vand.u32 %v13, 4294901760
  %306 = vmatprep.subr.mxu0 %v305
  %v307 = vand.u32 %v12, 4294901760
  %308 = vmatpush1.msra.mxu0 %v307
  %309 = vmatprep.subr.mxu0 0.0
  %310 = vmatpush2.msra.mxu0 0.0
  %311 = vmatprep.subr.mxu0 0.0
  %312 = vmatpush2.msra.mxu0 0.0
  %313 = vmatprep.subr.mxu0 0.0
  %314 = vmatpush2.msra.mxu0 0.0
  %315 = vmatprep.subr.mxu0 0.0
  %316 = vmatpush2.msra.mxu0 0.0
  %317 = vmatprep.subr.mxu0 0.0
  %318 = vmatpush2.msra.mxu0 0.0
  %319 = vmatprep.subr.mxu0 0.0
  %320 = vmatpush2.msra.mxu0 0.0
  %321 = vmatprep.subr.mxu0 0.0
  %322 = vmatpush2.msra.mxu0 0.0
  %323 = vmatprep.subr.mxu0 0.0
  %324 = vmatpush2.msra.mxu0 0.0
  %325 = vmatprep.subr.mxu0 0.0
  %326 = vmatpush2.msra.mxu0 0.0
  %327 = vmatprep.subr.mxu0 0.0
  %328 = vmatpush2.msra.mxu0 0.0
  %329 = vmatprep.subr.mxu0 0.0
  %330 = vmatpush2.msra.mxu0 0.0
  %331 = vmatprep.subr.mxu0 0.0
  %332 = vmatpush2.msra.mxu0 0.0
  %333 = vmatprep.subr.mxu0 0.0
  %334 = vmatpush2.msra.mxu0 0.0
  %335 = vmatprep.subr.mxu0 0.0
  %336 = vmatpush2.msra.mxu0 0.0
  %337 = vmatprep.subr.mxu0 0.0
  %338 = vmatpush2.msra.mxu0 0.0
  %339 = vmatprep.subr.mxu0 0.0
  %340 = vmatpush2.msra.mxu0 0.0
  %341 = vmatprep.mubr.f32.mxu0 0.0
  %v342 = vand.u32 %v18, 4294901760
  %v343 = vsub.f32 %v18, %v342
  %v344 = vand.u32 %v343, 4294901760
  %345 = vmatmul.mubr.f32.gmra.mxu0 %v344
  %v346 = vpop.f32.mrf.mxu0
  %v347 = vadd.f32 %v269, %v346
  %v348 = vpop.f32.mrf.mxu0
  %v349 = vadd.f32 %v271, %v348
  %350 = vdwg.mxu0
  %351 = vmatprep.subr.mxu0 0.0
  %352 = vmatpush1.msra.mxu0 0.0
  %353 = vmatprep.subr.mxu0 0.0
  %354 = vmatpush1.msra.mxu0 0.0
  %355 = vmatprep.subr.mxu0 0.0
  %356 = vmatpush1.msra.mxu0 0.0
  %357 = vmatprep.subr.mxu0 0.0
  %358 = vmatpush1.msra.mxu0 0.0
  %359 = vmatprep.subr.mxu0 0.0
  %360 = vmatpush1.msra.mxu0 0.0
  %361 = vmatprep.subr.mxu0 0.0
  %362 = vmatpush1.msra.mxu0 0.0
  %363 = vmatprep.subr.mxu0 0.0
  %364 = vmatpush1.msra.mxu0 0.0
  %365 = vmatprep.subr.mxu0 0.0
  %366 = vmatpush1.msra.mxu0 0.0
  %367 = vmatprep.subr.mxu0 0.0
  %368 = vmatpush1.msra.mxu0 0.0
  %369 = vmatprep.subr.mxu0 0.0
  %370 = vmatpush1.msra.mxu0 0.0
  %371 = vmatprep.subr.mxu0 0.0
  %372 = vmatpush1.msra.mxu0 0.0
  %373 = vmatprep.subr.mxu0 0.0
  %374 = vmatpush1.msra.mxu0 0.0
  %375 = vmatprep.subr.mxu0 0.0
  %376 = vmatpush1.msra.mxu0 0.0
  %377 = vmatprep.subr.mxu0 0.0
  %378 = vmatpush1.msra.mxu0 0.0
  %v379 = vand.u32 %v15, 4294901760
  %v380 = vsub.f32 %v15, %v379
  %v381 = vand.u32 %v380, 4294901760
  %382 = vmatprep.subr.mxu0 %v381
  %v383 = vand.u32 %v14, 4294901760
  %v384 = vsub.f32 %v14, %v383
  %v385 = vand.u32 %v384, 4294901760
  %386 = vmatpush1.msra.mxu0 %v385
  %v387 = vand.u32 %v13, 4294901760
  %v388 = vsub.f32 %v13, %v387
  %v389 = vand.u32 %v388, 4294901760
  %390 = vmatprep.subr.mxu0 %v389
  %v391 = vand.u32 %v12, 4294901760
  %v392 = vsub.f32 %v12, %v391
  %v393 = vand.u32 %v392, 4294901760
  %394 = vmatpush1.msra.mxu0 %v393
  %395 = vmatprep.subr.mxu0 0.0
  %396 = vmatpush2.msra.mxu0 0.0
  %397 = vmatprep.subr.mxu0 0.0
  %398 = vmatpush2.msra.mxu0 0.0
  %399 = vmatprep.subr.mxu0 0.0
  %400 = vmatpush2.msra.mxu0 0.0
  %401 = vmatprep.subr.mxu0 0.0
  %402 = vmatpush2.msra.mxu0 0.0
  %403 = vmatprep.subr.mxu0 0.0
  %404 = vmatpush2.msra.mxu0 0.0
  %405 = vmatprep.subr.mxu0 0.0
  %406 = vmatpush2.msra.mxu0 0.0
  %407 = vmatprep.subr.mxu0 0.0
  %408 = vmatpush2.msra.mxu0 0.0
  %409 = vmatprep.subr.mxu0 0.0
  %410 = vmatpush2.msra.mxu0 0.0
  %411 = vmatprep.subr.mxu0 0.0
  %412 = vmatpush2.msra.mxu0 0.0
  %413 = vmatprep.subr.mxu0 0.0
  %414 = vmatpush2.msra.mxu0 0.0
  %415 = vmatprep.subr.mxu0 0.0
  %416 = vmatpush2.msra.mxu0 0.0
  %417 = vmatprep.subr.mxu0 0.0
  %418 = vmatpush2.msra.mxu0 0.0
  %419 = vmatprep.subr.mxu0 0.0
  %420 = vmatpush2.msra.mxu0 0.0
  %421 = vmatprep.subr.mxu0 0.0
  %422 = vmatpush2.msra.mxu0 0.0
  %423 = vmatprep.subr.mxu0 0.0
  %424 = vmatpush2.msra.mxu0 0.0
  %425 = vmatprep.subr.mxu0 0.0
  %426 = vmatpush2.msra.mxu0 0.0
  %427 = vmatprep.mubr.f32.mxu0 0.0
  %v428 = vand.u32 %v18, 4294901760
  %429 = vmatmul.mubr.f32.gmra.mxu0 %v428
  %v430 = vpop.f32.mrf.mxu0
  %v431 = vadd.f32 %v347, %v430
  %v432 = vpop.f32.mrf.mxu0
  %v433 = vadd.f32 %v349, %v432
  %434 = vdwg.mxu0
  %435 = vmatprep.subr.mxu0 0.0
  %436 = vmatpush1.msra.mxu0 0.0
  %437 = vmatprep.subr.mxu0 0.0
  %438 = vmatpush1.msra.mxu0 0.0
  %439 = vmatprep.subr.mxu0 0.0
  %440 = vmatpush1.msra.mxu0 0.0
  %441 = vmatprep.subr.mxu0 0.0
  %442 = vmatpush1.msra.mxu0 0.0
  %443 = vmatprep.subr.mxu0 0.0
  %444 = vmatpush1.msra.mxu0 0.0
  %445 = vmatprep.subr.mxu0 0.0
  %446 = vmatpush1.msra.mxu0 0.0
  %447 = vmatprep.subr.mxu0 0.0
  %448 = vmatpush1.msra.mxu0 0.0
  %449 = vmatprep.subr.mxu0 0.0
  %450 = vmatpush1.msra.mxu0 0.0
  %451 = vmatprep.subr.mxu0 0.0
  %452 = vmatpush1.msra.mxu0 0.0
  %453 = vmatprep.subr.mxu0 0.0
  %454 = vmatpush1.msra.mxu0 0.0
  %455 = vmatprep.subr.mxu0 0.0
  %456 = vmatpush1.msra.mxu0 0.0
  %457 = vmatprep.subr.mxu0 0.0
  %458 = vmatpush1.msra.mxu0 0.0
  %459 = vmatprep.subr.mxu0 0.0
  %460 = vmatpush1.msra.mxu0 0.0
  %461 = vmatprep.subr.mxu0 0.0
  %462 = vmatpush1.msra.mxu0 0.0
  %v463 = vand.u32 %v15, 4294901760
  %464 = vmatprep.subr.mxu0 %v463
  %v465 = vand.u32 %v14, 4294901760
  %466 = vmatpush1.msra.mxu0 %v465
  %v467 = vand.u32 %v13, 4294901760
  %468 = vmatprep.subr.mxu0 %v467
  %v469 = vand.u32 %v12, 4294901760
  %470 = vmatpush1.msra.mxu0 %v469
  %471 = vmatprep.subr.mxu0 0.0
  %472 = vmatpush2.msra.mxu0 0.0
  %473 = vmatprep.subr.mxu0 0.0
  %474 = vmatpush2.msra.mxu0 0.0
  %475 = vmatprep.subr.mxu0 0.0
  %476 = vmatpush2.msra.mxu0 0.0
  %477 = vmatprep.subr.mxu0 0.0
  %478 = vmatpush2.msra.mxu0 0.0
  %479 = vmatprep.subr.mxu0 0.0
  %480 = vmatpush2.msra.mxu0 0.0
  %481 = vmatprep.subr.mxu0 0.0
  %482 = vmatpush2.msra.mxu0 0.0
  %483 = vmatprep.subr.mxu0 0.0
  %484 = vmatpush2.msra.mxu0 0.0
  %485 = vmatprep.subr.mxu0 0.0
  %486 = vmatpush2.msra.mxu0 0.0
  %487 = vmatprep.subr.mxu0 0.0
  %488 = vmatpush2.msra.mxu0 0.0
  %489 = vmatprep.subr.mxu0 0.0
  %490 = vmatpush2.msra.mxu0 0.0
  %491 = vmatprep.subr.mxu0 0.0
  %492 = vmatpush2.msra.mxu0 0.0
  %493 = vmatprep.subr.mxu0 0.0
  %494 = vmatpush2.msra.mxu0 0.0
  %495 = vmatprep.subr.mxu0 0.0
  %496 = vmatpush2.msra.mxu0 0.0
  %497 = vmatprep.subr.mxu0 0.0
  %498 = vmatpush2.msra.mxu0 0.0
  %499 = vmatprep.subr.mxu0 0.0
  %500 = vmatpush2.msra.mxu0 0.0
  %501 = vmatprep.subr.mxu0 0.0
  %502 = vmatpush2.msra.mxu0 0.0
  %503 = vmatprep.mubr.f32.mxu0 0.0
  %v504 = vand.u32 %v18, 4294901760
  %505 = vmatmul.mubr.f32.gmra.mxu0 %v504
  %v506 = vpop.f32.mrf.mxu0
  %v507 = vadd.f32 %v431, %v506
  %v508 = vpop.f32.mrf.mxu0
  %v509 = vadd.f32 %v433, %v508
  %510 = vdwg.mxu0
  %v511 = vand.u32 2147483647, %v507
  %vm512 = vcmp.le.f32.partialorder %v511, 0.7853982
  %vm513 = vcmp.lt.s32.totalorder %v507, 0
  %v514 = vand.u32 %v507, 2139095040
  %v515 = vshrl.u32 %v514, 23
  %v516 = vsub.s32 %v515, 127
  %v517 = vand.u32 2147483647, %v507
  %v518 = vand.u32 %v517, 8388607
  %v519 = vor.u32 %v518, 8388608
  %v520 = vsub.s32 0, %v519
  %v521 = vadd.s32 %v516, 1
  %vm522 = vcmp.gt.s32.totalorder %v521, 0
  %v523 = vsel %vm522, %v521, 0
  %v524 = vshrl.u32 %v523, 5
  %v525 = vand.u32 %v523, 31
  %v526 = vsub.s32 32, %v525
  %v527 = vshrl.u32 683565275, %v526
  %v528 = vshll.u32 683565275, %v525
  %v529 = vshrl.u32 2475754826, %v526
  %v530 = vor.u32 %v528, %v529
  %v531 = vshll.u32 2475754826, %v525
  %v532 = vshrl.u32 2131351028, %v526
  %v533 = vor.u32 %v531, %v532
  %v534 = vshll.u32 2131351028, %v525
  %v535 = vshrl.u32 2102212464, %v526
  %v536 = vor.u32 %v534, %v535
  %v537 = vshll.u32 2102212464, %v525
  %v538 = vshrl.u32 920167782, %v526
  %v539 = vor.u32 %v537, %v538
  %v540 = vshll.u32 920167782, %v525
  %v541 = vshrl.u32 1326507024, %v526
  %v542 = vor.u32 %v540, %v541
  %vm543 = vcmp.lt.s32.totalorder %v524, 1
  %vm544 = vcmp.lt.s32.totalorder %v524, 2
  %vm545 = vcmp.lt.s32.totalorder %v524, 3
  %vm546 = vcmp.lt.s32.totalorder %v524, 4
  %v547 = vsel %vm543, %v527, %v530
  %v548 = vsel %vm546, %v536, 2102212464
  %v549 = vsel %vm545, %v533, %v548
  %v550 = vsel %vm544, %v547, %v549
  %v551 = vsel %vm543, %v530, %v533
  %v552 = vsel %vm546, %v539, 920167782
  %v553 = vsel %vm545, %v536, %v552
  %v554 = vsel %vm544, %v551, %v553
  %v555 = vsel %vm543, %v533, %v536
  %v556 = vsel %vm546, %v542, 1326507024
  %v557 = vsel %vm545, %v539, %v556
  %v558 = vsel %vm544, %v555, %v557
  %v559 = vshll.u32 %v519, 8
  %v560 = vmul.u32.u64.compose %v559, %v558
  %v561 = vextract.low.u32 %v560
  %v562 = vextract.high.u32 %v560
  %v563 = vmul.u32.u64.compose %v559, %v554
  %v564 = vextract.low.u32 %v563
  %v565 = vextract.high.u32 %v563
  %v566 = vmul.u32 %v559, %v550
  %v567 = vadd.s32 %v562, %v564
  %vm568 = vc.u32 %v562, %v564
  %v569 = vadd.s32 %v565, 1
  %v570 = vsel %vm568, %v569, %v565
  %v571 = vadd.s32 %v566, %v570
  %v572 = vadd.s32 %v571, 536870912
  %v573 = vshrl.u32 %v572, 30
  %v574 = vshll.u32 %v573, 30
  %v575 = vsub.s32 %v571, %v574
  %vm576 = vcmp.lt.s32.totalorder %v575, 0
  %v577 = vsub.s32 0, %v575
  %v578 = vsel %vm576, %v577, %v575
  %v579 = vclz %v578
  %v580 = vsub.s32 %v579, 2
  %vm581 = vcmp.gt.s32.totalorder 0, %v580
  %v582 = vsel %vm581, 0, %v580
  %v583 = vsub.s32 32, %v582
  %v584 = vshll.u32 %v575, %v582
  %v585 = vshrl.u32 %v567, %v583
  %v586 = vor.u32 %v584, %v585
  %v587 = vsub.s32 4294967266, %v582
  %v588 = vadd.s32 %v587, 127
  %v589 = vshll.u32 %v588, 23
  %v590 = vor.u32 4788187, %v589
  %v591 = vand.u32 2147483647, %v590
  %v593 = vcvt.s32.f32 %v586
  %v594 = vmul.f32 %v593, %v591
  %v595 = vxor.u32 %v594, 2147483648
  %v596 = vsel %vm513, %v595, %v594
  %v597 = vsub.s32 4, %v573
  %v598 = vsel %vm513, %v597, %v573
  %v599 = vsel %vm512, %v507, %v596
  %v600 = vsel %vm512, 0, %v598
  %v601 = vcosq.f32.pop %v599
  %v602 = vsinq.f32.pop %v599
  %vm603 = vweird.f32 %v507
  %v604 = vand.u32 %v600, 3
  %vm605 = vcmp.lt.s32.totalorder %v604, 2
  %vm606 = vcmp.eq.s32.totalorder %v604, 0
  %v607 = vxor.u32 %v602, 2147483648
  %v608 = vsel %vm606, %v601, %v607
  %vm609 = vcmp.eq.s32.totalorder %v604, 2
  %v610 = vxor.u32 %v601, 2147483648
  %v611 = vsel %vm609, %v610, %v602
  %v612 = vsel %vm605, %v608, %v611
  %v613 = vsel %vm603, nan, %v612
  %v614 = vand.u32 2147483647, %v509
  %vm615 = vcmp.le.f32.partialorder %v614, 0.7853982
  %vm616 = vcmp.lt.s32.totalorder %v509, 0
  %v617 = vand.u32 %v509, 2139095040
  %v618 = vshrl.u32 %v617, 23
  %v619 = vsub.s32 %v618, 127
  %v620 = vand.u32 2147483647, %v509
  %v621 = vand.u32 %v620, 8388607
  %v622 = vor.u32 %v621, 8388608
  %v623 = vsub.s32 0, %v622
  %v624 = vadd.s32 %v619, 1
  %vm625 = vcmp.gt.s32.totalorder %v624, 0
  %v626 = vsel %vm625, %v624, 0
  %v627 = vshrl.u32 %v626, 5
  %v628 = vand.u32 %v626, 31
  %v629 = vsub.s32 32, %v628
  %v630 = vshrl.u32 683565275, %v629
  %v631 = vshll.u32 683565275, %v628
  %v632 = vshrl.u32 2475754826, %v629
  %v633 = vor.u32 %v631, %v632
  %v634 = vshll.u32 2475754826, %v628
  %v635 = vshrl.u32 2131351028, %v629
  %v636 = vor.u32 %v634, %v635
  %v637 = vshll.u32 2131351028, %v628
  %v638 = vshrl.u32 2102212464, %v629
  %v639 = vor.u32 %v637, %v638
  %v640 = vshll.u32 2102212464, %v628
  %v641 = vshrl.u32 920167782, %v629
  %v642 = vor.u32 %v640, %v641
  %v643 = vshll.u32 920167782, %v628
  %v644 = vshrl.u32 1326507024, %v629
  %v645 = vor.u32 %v643, %v644
  %vm646 = vcmp.lt.s32.totalorder %v627, 1
  %vm647 = vcmp.lt.s32.totalorder %v627, 2
  %vm648 = vcmp.lt.s32.totalorder %v627, 3
  %vm649 = vcmp.lt.s32.totalorder %v627, 4
  %v650 = vsel %vm646, %v630, %v633
  %v651 = vsel %vm649, %v639, 2102212464
  %v652 = vsel %vm648, %v636, %v651
  %v653 = vsel %vm647, %v650, %v652
  %v654 = vsel %vm646, %v633, %v636
  %v655 = vsel %vm649, %v642, 920167782
  %v656 = vsel %vm648, %v639, %v655
  %v657 = vsel %vm647, %v654, %v656
  %v658 = vsel %vm646, %v636, %v639
  %v659 = vsel %vm649, %v645, 1326507024
  %v660 = vsel %vm648, %v642, %v659
  %v661 = vsel %vm647, %v658, %v660
  %v662 = vshll.u32 %v622, 8
  %v663 = vmul.u32.u64.compose %v662, %v661
  %v664 = vextract.low.u32 %v663
  %v665 = vextract.high.u32 %v663
  %v666 = vmul.u32.u64.compose %v662, %v657
  %v667 = vextract.low.u32 %v666
  %v668 = vextract.high.u32 %v666
  %v669 = vmul.u32 %v662, %v653
  %v670 = vadd.s32 %v665, %v667
  %vm671 = vc.u32 %v665, %v667
  %v672 = vadd.s32 %v668, 1
  %v673 = vsel %vm671, %v672, %v668
  %v674 = vadd.s32 %v669, %v673
  %v675 = vadd.s32 %v674, 536870912
  %v676 = vshrl.u32 %v675, 30
  %v677 = vshll.u32 %v676, 30
  %v678 = vsub.s32 %v674, %v677
  %vm679 = vcmp.lt.s32.totalorder %v678, 0
  %v680 = vsub.s32 0, %v678
  %v681 = vsel %vm679, %v680, %v678
  %v682 = vclz %v681
  %v683 = vsub.s32 %v682, 2
  %vm684 = vcmp.gt.s32.totalorder 0, %v683
  %v685 = vsel %vm684, 0, %v683
  %v686 = vsub.s32 32, %v685
  %v687 = vshll.u32 %v678, %v685
  %v688 = vshrl.u32 %v670, %v686
  %v689 = vor.u32 %v687, %v688
  %v690 = vsub.s32 4294967266, %v685
  %v691 = vadd.s32 %v690, 127
  %v692 = vshll.u32 %v691, 23
  %v693 = vor.u32 4788187, %v692
  %v694 = vand.u32 2147483647, %v693
  %v696 = vcvt.s32.f32 %v689
  %v697 = vmul.f32 %v696, %v694
  %v698 = vxor.u32 %v697, 2147483648
  %v699 = vsel %vm616, %v698, %v697
  %v700 = vsub.s32 4, %v676
  %v701 = vsel %vm616, %v700, %v676
  %v702 = vsel %vm615, %v509, %v699
  %v703 = vsel %vm615, 0, %v701
  %v704 = vcosq.f32.pop %v702
  %v705 = vsinq.f32.pop %v702
  %vm706 = vweird.f32 %v509
  %v707 = vand.u32 %v703, 3
  %vm708 = vcmp.lt.s32.totalorder %v707, 2
  %vm709 = vcmp.eq.s32.totalorder %v707, 0
  %v710 = vxor.u32 %v705, 2147483648
  %v711 = vsel %vm709, %v704, %v710
  %vm712 = vcmp.eq.s32.totalorder %v707, 2
  %v713 = vxor.u32 %v704, 2147483648
  %v714 = vsel %vm712, %v713, %v705
  %v715 = vsel %vm708, %v711, %v714
  %v716 = vsel %vm706, nan, %v715
  %717 = vst [vmem:[%s2] sm:$0xff] %v613
  %718 = vst [vmem:[%s2 + $0x8] sm:$0xff] %v716
  %v719 = vand.u32 2147483647, %v507
  %vm720 = vcmp.le.f32.partialorder %v719, 0.7853982
  %vm721 = vcmp.lt.s32.totalorder %v507, 0
  %v722 = vand.u32 %v507, 2139095040
  %v723 = vshrl.u32 %v722, 23
  %v724 = vsub.s32 %v723, 127
  %v725 = vand.u32 2147483647, %v507
  %v726 = vand.u32 %v725, 8388607
  %v727 = vor.u32 %v726, 8388608
  %v728 = vsub.s32 0, %v727
  %v729 = vadd.s32 %v724, 1
  %vm730 = vcmp.gt.s32.totalorder %v729, 0
  %v731 = vsel %vm730, %v729, 0
  %v732 = vshrl.u32 %v731, 5
  %v733 = vand.u32 %v731, 31
  %v734 = vsub.s32 32, %v733
  %v735 = vshrl.u32 683565275, %v734
  %v736 = vshll.u32 683565275, %v733
  %v737 = vshrl.u32 2475754826, %v734
  %v738 = vor.u32 %v736, %v737
  %v739 = vshll.u32 2475754826, %v733
  %v740 = vshrl.u32 2131351028, %v734
  %v741 = vor.u32 %v739, %v740
  %v742 = vshll.u32 2131351028, %v733
  %v743 = vshrl.u32 2102212464, %v734
  %v744 = vor.u32 %v742, %v743
  %v745 = vshll.u32 2102212464, %v733
  %v746 = vshrl.u32 920167782, %v734
  %v747 = vor.u32 %v745, %v746
  %v748 = vshll.u32 920167782, %v733
  %v749 = vshrl.u32 1326507024, %v734
  %v750 = vor.u32 %v748, %v749
  %vm751 = vcmp.lt.s32.totalorder %v732, 1
  %vm752 = vcmp.lt.s32.totalorder %v732, 2
  %vm753 = vcmp.lt.s32.totalorder %v732, 3
  %vm754 = vcmp.lt.s32.totalorder %v732, 4
  %v755 = vsel %vm751, %v735, %v738
  %v756 = vsel %vm754, %v744, 2102212464
  %v757 = vsel %vm753, %v741, %v756
  %v758 = vsel %vm752, %v755, %v757
  %v759 = vsel %vm751, %v738, %v741
  %v760 = vsel %vm754, %v747, 920167782
  %v761 = vsel %vm753, %v744, %v760
  %v762 = vsel %vm752, %v759, %v761
  %v763 = vsel %vm751, %v741, %v744
  %v764 = vsel %vm754, %v750, 1326507024
  %v765 = vsel %vm753, %v747, %v764
  %v766 = vsel %vm752, %v763, %v765
  %v767 = vshll.u32 %v727, 8
  %v768 = vmul.u32.u64.compose %v767, %v766
  %v769 = vextract.low.u32 %v768
  %v770 = vextract.high.u32 %v768
  %v771 = vmul.u32.u64.compose %v767, %v762
  %v772 = vextract.low.u32 %v771
  %v773 = vextract.high.u32 %v771
  %v774 = vmul.u32 %v767, %v758
  %v775 = vadd.s32 %v770, %v772
  %vm776 = vc.u32 %v770, %v772
  %v777 = vadd.s32 %v773, 1
  %v778 = vsel %vm776, %v777, %v773
  %v779 = vadd.s32 %v774, %v778
  %v780 = vadd.s32 %v779, 536870912
  %v781 = vshrl.u32 %v780, 30
  %v782 = vshll.u32 %v781, 30
  %v783 = vsub.s32 %v779, %v782
  %vm784 = vcmp.lt.s32.totalorder %v783, 0
  %v785 = vsub.s32 0, %v783
  %v786 = vsel %vm784, %v785, %v783
  %v787 = vclz %v786
  %v788 = vsub.s32 %v787, 2
  %vm789 = vcmp.gt.s32.totalorder 0, %v788
  %v790 = vsel %vm789, 0, %v788
  %v791 = vsub.s32 32, %v790
  %v792 = vshll.u32 %v783, %v790
  %v793 = vshrl.u32 %v775, %v791
  %v794 = vor.u32 %v792, %v793
  %v795 = vsub.s32 4294967266, %v790
  %v796 = vadd.s32 %v795, 127
  %v797 = vshll.u32 %v796, 23
  %v798 = vor.u32 4788187, %v797
  %v799 = vand.u32 2147483647, %v798
  %v801 = vcvt.s32.f32 %v794
  %v802 = vmul.f32 %v801, %v799
  %v803 = vxor.u32 %v802, 2147483648
  %v804 = vsel %vm721, %v803, %v802
  %v805 = vsub.s32 4, %v781
  %v806 = vsel %vm721, %v805, %v781
  %v807 = vsel %vm720, %v507, %v804
  %v808 = vsel %vm720, 0, %v806
  %v809 = vcosq.f32.pop %v807
  %v810 = vsinq.f32.pop %v807
  %vm811 = vweird.f32 %v507
  %v812 = vadd.s32 %v808, 3
  %v813 = vand.u32 %v812, 3
  %vm814 = vcmp.lt.s32.totalorder %v813, 2
  %vm815 = vcmp.eq.s32.totalorder %v813, 0
  %v816 = vxor.u32 %v810, 2147483648
  %v817 = vsel %vm815, %v809, %v816
  %vm818 = vcmp.eq.s32.totalorder %v813, 2
  %v819 = vxor.u32 %v809, 2147483648
  %v820 = vsel %vm818, %v819, %v810
  %v821 = vsel %vm814, %v817, %v820
  %v822 = vsel %vm811, nan, %v821
  %v823 = vand.u32 2147483647, %v509
  %vm824 = vcmp.le.f32.partialorder %v823, 0.7853982
  %vm825 = vcmp.lt.s32.totalorder %v509, 0
  %v826 = vand.u32 %v509, 2139095040
  %v827 = vshrl.u32 %v826, 23
  %v828 = vsub.s32 %v827, 127
  %v829 = vand.u32 2147483647, %v509
  %v830 = vand.u32 %v829, 8388607
  %v831 = vor.u32 %v830, 8388608
  %v832 = vsub.s32 0, %v831
  %v833 = vadd.s32 %v828, 1
  %vm834 = vcmp.gt.s32.totalorder %v833, 0
  %v835 = vsel %vm834, %v833, 0
  %v836 = vshrl.u32 %v835, 5
  %v837 = vand.u32 %v835, 31
  %v838 = vsub.s32 32, %v837
  %v839 = vshrl.u32 683565275, %v838
  %v840 = vshll.u32 683565275, %v837
  %v841 = vshrl.u32 2475754826, %v838
  %v842 = vor.u32 %v840, %v841
  %v843 = vshll.u32 2475754826, %v837
  %v844 = vshrl.u32 2131351028, %v838
  %v845 = vor.u32 %v843, %v844
  %v846 = vshll.u32 2131351028, %v837
  %v847 = vshrl.u32 2102212464, %v838
  %v848 = vor.u32 %v846, %v847
  %v849 = vshll.u32 2102212464, %v837
  %v850 = vshrl.u32 920167782, %v838
  %v851 = vor.u32 %v849, %v850
  %v852 = vshll.u32 920167782, %v837
  %v853 = vshrl.u32 1326507024, %v838
  %v854 = vor.u32 %v852, %v853
  %vm855 = vcmp.lt.s32.totalorder %v836, 1
  %vm856 = vcmp.lt.s32.totalorder %v836, 2
  %vm857 = vcmp.lt.s32.totalorder %v836, 3
  %vm858 = vcmp.lt.s32.totalorder %v836, 4
  %v859 = vsel %vm855, %v839, %v842
  %v860 = vsel %vm858, %v848, 2102212464
  %v861 = vsel %vm857, %v845, %v860
  %v862 = vsel %vm856, %v859, %v861
  %v863 = vsel %vm855, %v842, %v845
  %v864 = vsel %vm858, %v851, 920167782
  %v865 = vsel %vm857, %v848, %v864
  %v866 = vsel %vm856, %v863, %v865
  %v867 = vsel %vm855, %v845, %v848
  %v868 = vsel %vm858, %v854, 1326507024
  %v869 = vsel %vm857, %v851, %v868
  %v870 = vsel %vm856, %v867, %v869
  %v871 = vshll.u32 %v831, 8
  %v872 = vmul.u32.u64.compose %v871, %v870
  %v873 = vextract.low.u32 %v872
  %v874 = vextract.high.u32 %v872
  %v875 = vmul.u32.u64.compose %v871, %v866
  %v876 = vextract.low.u32 %v875
  %v877 = vextract.high.u32 %v875
  %v878 = vmul.u32 %v871, %v862
  %v879 = vadd.s32 %v874, %v876
  %vm880 = vc.u32 %v874, %v876
  %v881 = vadd.s32 %v877, 1
  %v882 = vsel %vm880, %v881, %v877
  %v883 = vadd.s32 %v878, %v882
  %v884 = vadd.s32 %v883, 536870912
  %v885 = vshrl.u32 %v884, 30
  %v886 = vshll.u32 %v885, 30
  %v887 = vsub.s32 %v883, %v886
  %vm888 = vcmp.lt.s32.totalorder %v887, 0
  %v889 = vsub.s32 0, %v887
  %v890 = vsel %vm888, %v889, %v887
  %v891 = vclz %v890
  %v892 = vsub.s32 %v891, 2
  %vm893 = vcmp.gt.s32.totalorder 0, %v892
  %v894 = vsel %vm893, 0, %v892
  %v895 = vsub.s32 32, %v894
  %v896 = vshll.u32 %v887, %v894
  %v897 = vshrl.u32 %v879, %v895
  %v898 = vor.u32 %v896, %v897
  %v899 = vsub.s32 4294967266, %v894
  %v900 = vadd.s32 %v899, 127
  %v901 = vshll.u32 %v900, 23
  %v902 = vor.u32 4788187, %v901
  %v903 = vand.u32 2147483647, %v902
  %v905 = vcvt.s32.f32 %v898
  %v906 = vmul.f32 %v905, %v903
  %v907 = vxor.u32 %v906, 2147483648
  %v908 = vsel %vm825, %v907, %v906
  %v909 = vsub.s32 4, %v885
  %v910 = vsel %vm825, %v909, %v885
  %v911 = vsel %vm824, %v509, %v908
  %v912 = vsel %vm824, 0, %v910
  %v913 = vcosq.f32.pop %v911
  %v914 = vsinq.f32.pop %v911
  %vm915 = vweird.f32 %v509
  %v916 = vadd.s32 %v912, 3
  %v917 = vand.u32 %v916, 3
  %vm918 = vcmp.lt.s32.totalorder %v917, 2
  %vm919 = vcmp.eq.s32.totalorder %v917, 0
  %v920 = vxor.u32 %v914, 2147483648
  %v921 = vsel %vm919, %v913, %v920
  %vm922 = vcmp.eq.s32.totalorder %v917, 2
  %v923 = vxor.u32 %v913, 2147483648
  %v924 = vsel %vm922, %v923, %v914
  %v925 = vsel %vm918, %v921, %v924
  %v926 = vsel %vm915, nan, %v925
  %s927 = scalar_lea.vmem %s2, 16
  %928 = vst [vmem:[%s927] sm:$0xff] %v822
  %929 = vst [vmem:[%s927 + $0x8] sm:$0xff] %v926
  // Predicated region
  $region10: #{learnable_fourier_pe.1} parent=0 // pred_check
    _
  $region11: #{learnable_fourier_pe.1} parent=0 // pred_check_branch
    %931 = sbr.rel (0) target = $region13
  $region12: #{learnable_fourier_pe.1} parent=0 // pred_region
    _
  $region13: #{learnable_fourier_pe.1} parent=0 // pred_fallthru
    _
  // Predicated region
  $region14: #{learnable_fourier_pe.1} parent=0 // pred_check
    _
  $region15: #{learnable_fourier_pe.1} parent=0 // pred_check_branch
    %933 = sbr.rel (0) target = $region17
  $region16: #{learnable_fourier_pe.1} parent=0 // pred_region
    _
  $region17: #{learnable_fourier_pe.1} parent=0 // pred_fallthru
    _

</llo_original>
